<compile_context>
chip_gen: v7x
topology: tpu7x:2x2x1
jax: 0.10.0
libtpu: 0.0.40
codegen_flags: <defaults>
</compile_context>

<pallas_src>
import functools

import jax
import jax.numpy as jnp
from jax.experimental import pallas as pl
from jax.experimental.pallas import tpu as pltpu

_LANE = 128


def _round_up(x: int, m: int) -> int:
    return ((x + m - 1) // m) * m


def _pinball_kernel(q_ref, preds_ref, target_ref, out_ref, *, lane_chunks):
    """One lane-dense batch tile -> (Q, 128) partial sums (pure VPU filler)."""
    q = q_ref[...]            # (Q, 1)   resident quantile column
    preds = preds_ref[...]    # (Q, TB)  lane-dense batch tile
    target = target_ref[...]  # (1, TB)  broadcasts over sublanes

    errors = target - preds                                    # (Q, TB)
    # max((q-1)*e, q*e) == q*e + max(-e, 0): one mul + one relu + one add.
    losses = q * errors + jnp.maximum(-errors, 0.0)             # (Q, TB)

    # Fold the TB lanes into a single 128-lane vreg column per quantile.
    # Slices are 128-lane aligned -> no relayout, just vadds.
    acc = losses[:, 0:_LANE]
    for c in range(1, lane_chunks):
        acc = acc + losses[:, c * _LANE:(c + 1) * _LANE]

    out_ref[0] = acc          # (Q, 128) partial for this tile


def pinball_loss(preds: jax.Array, target: jax.Array, quantiles: jax.Array,
                 *, batch_tile: int | None = None) -> jax.Array:
    """Pinball loss. preds: (B, Q), target: (B, 1), quantiles: (Q,). Scalar out."""
    B, Q = preds.shape
    assert target.shape == (B, 1)
    assert quantiles.shape == (Q,)

    # Keep the elementwise path in f32 (v5e has no bf16 VPU; kernel is mem-bound).
    preds_t = preds.astype(jnp.float32).T              # (Q, B) batch on lanes
    target_row = target.astype(jnp.float32).reshape(1, B)
    q_col = quantiles.astype(jnp.float32).reshape(Q, 1)

    # Lane-dense tile: multiple of 128, capped so the double-buffered working
    # set and the in-kernel unrolled lane-fold stay small on every chip
    # (v7x has only 64 MiB of physical VMEM).
    if batch_tile is None:
        tb = min(_round_up(B, _LANE), 8192)
    else:
        tb = _round_up(batch_tile, _LANE)

    # Zero-pad the batch so every tile is full. Zero preds + zero target give
    # exactly zero loss contribution, so no masking is needed.
    B_pad = _round_up(B, tb)
    if B_pad != B:
        pad = B_pad - B
        preds_t = jnp.pad(preds_t, ((0, 0), (0, pad)))
        target_row = jnp.pad(target_row, ((0, 0), (0, pad)))

    num_tiles = B_pad // tb
    lane_chunks = tb // _LANE

    kernel = functools.partial(_pinball_kernel, lane_chunks=lane_chunks)

    partials = pl.pallas_call(
        kernel,
        out_shape=jax.ShapeDtypeStruct((num_tiles, Q, _LANE), jnp.float32),
        grid_spec=pltpu.PrefetchScalarGridSpec(
            num_scalar_prefetch=0,
            grid=(num_tiles,),
            in_specs=[
                pl.BlockSpec((Q, 1), lambda i: (0, 0)),     # quantiles (resident)
                pl.BlockSpec((Q, tb), lambda i: (0, i)),    # preds tile (lane-dense)
                pl.BlockSpec((1, tb), lambda i: (0, i)),    # target tile (lane-dense)
            ],
            out_specs=pl.BlockSpec((1, Q, _LANE), lambda i: (i, 0, 0)),
        ),
        compiler_params=pltpu.CompilerParams(
            dimension_semantics=("parallel",),      # independent tiles -> megacore-shardable
            vmem_limit_bytes=32 * 1024 * 1024,      # explicit; safe on v5e/v6e/v7x
        ),
    )(q_col, preds_t, target_row)

    # Single cross-tile / cross-lane reduction + normalization, done once.
    return jnp.sum(partials) / jnp.float32(B)


def pinball_loss_ref(preds, target, quantiles):
    """Pure-JAX reference mirroring the PyTorch forward."""
    errors = target.astype(jnp.float32) - preds.astype(jnp.float32)
    q = quantiles.astype(jnp.float32).reshape(1, -1)
    losses = jnp.maximum((q - 1.0) * errors, q * errors)
    return jnp.mean(jnp.sum(losses, axis=1))


if __name__ == "__main__":
    key = jax.random.PRNGKey(0)
    k1, k2, k3, k4 = jax.random.split(key, 4)

    quantiles = jnp.array([0.1, 0.5, 0.9], dtype=jnp.float32)  # Q = 3
    Q = quantiles.shape[0]

    # Case 1: small batch (single padded tile).
    B1 = 16
    preds1 = jax.random.normal(k1, (B1, Q), dtype=jnp.float32)
    target1 = jax.random.normal(k2, (B1, 1), dtype=jnp.float32)
    loss1 = jax.block_until_ready(pinball_loss(preds1, target1, quantiles))
    ref1 = pinball_loss_ref(preds1, target1, quantiles)
    assert jnp.allclose(loss1, ref1, rtol=1e-5, atol=1e-6), (loss1, ref1)

    # Case 2: multi-tile grid with a ragged (padded) tail.
    B2 = 300
    preds2 = jax.random.normal(k3, (B2, Q), dtype=jnp.float32)
    target2 = jax.random.normal(k4, (B2, 1), dtype=jnp.float32)
    loss2 = jax.block_until_ready(pinball_loss(preds2, target2, quantiles,
                                               batch_tile=128))
    ref2 = pinball_loss_ref(preds2, target2, quantiles)
    assert jnp.allclose(loss2, ref2, rtol=1e-5, atol=1e-6), (loss2, ref2)

    print("KERNEL_OK")
</pallas_src>

<mosaic_0001>
module attributes {stable_mosaic.version = 11 : i64} {
  func.func @_pinball_kernel(%arg0: i32, %arg1: memref<3x1xf32, #tpu.memory_space<vmem>>, %arg2: memref<3x128xf32, #tpu.memory_space<vmem>>, %arg3: memref<1x128xf32, #tpu.memory_space<vmem>>, %arg4: memref<1x3x128xf32, #tpu.memory_space<vmem>>) attributes {dimension_semantics = [#tpu.dimension_semantics<parallel>], iteration_bounds = array<i64: 1>, scalar_prefetch = 0 : i64, scratch_operands = 0 : i64, tpu.core_type = #tpu.core_type<tc>, window_params = [{pipeline_mode = #tpu.pipeline_mode<synchronous>, transform_indices = @transform_0, window_bounds = array<i64: 3, 1>}, {transform_indices = @transform_1, window_bounds = array<i64: 3, 128>}, {transform_indices = @transform_2, window_bounds = array<i64: 1, 128>}, {transform_indices = @transform_3, window_bounds = array<i64: 1, 3, 128>}]} {
    %c0 = arith.constant 0 : index
    %c0_0 = arith.constant 0 : index
    %0 = vector.load %arg1[%c0, %c0_0] : memref<3x1xf32, #tpu.memory_space<vmem>>, vector<3x1xf32>
    %c0_1 = arith.constant 0 : index
    %c0_2 = arith.constant 0 : index
    %1 = vector.load %arg2[%c0_1, %c0_2] : memref<3x128xf32, #tpu.memory_space<vmem>>, vector<3x128xf32>
    %c0_3 = arith.constant 0 : index
    %c0_4 = arith.constant 0 : index
    %2 = vector.load %arg3[%c0_3, %c0_4] : memref<1x128xf32, #tpu.memory_space<vmem>>, vector<1x128xf32>
    %3 = vector.broadcast %2 : vector<1x128xf32> to vector<3x128xf32>
    %4 = arith.subf %3, %1 : vector<3x128xf32>
    %5 = vector.broadcast %0 : vector<3x1xf32> to vector<3x128xf32>
    %6 = arith.mulf %5, %4 : vector<3x128xf32>
    %cst = arith.constant 0.000000e+00 : f32
    %7 = vector.broadcast %cst : f32 to vector<3x128xf32>
    %8 = arith.subf %7, %4 : vector<3x128xf32>
    %cst_5 = arith.constant 0.000000e+00 : f32
    %9 = vector.broadcast %cst_5 : f32 to vector<3x128xf32>
    %10 = arith.maximumf %8, %9 : vector<3x128xf32>
    %11 = arith.addf %6, %10 : vector<3x128xf32>
    %c0_6 = arith.constant 0 : index
    %c0_7 = arith.constant 0 : index
    %c0_8 = arith.constant 0 : index
    %12 = vector.load %arg4[%c0_6, %c0_7, %c0_8] : memref<1x3x128xf32, #tpu.memory_space<vmem>>, vector<1x3x128xf32>
    %13 = vector.shape_cast %12 : vector<1x3x128xf32> to vector<3x128xf32>
    %14 = vector.shape_cast %11 : vector<3x128xf32> to vector<1x3x128xf32>
    tpu.vector_store %arg4[%c0_6, %c0_7, %c0_8], %14 {strides = array<i32>} : memref<1x3x128xf32, #tpu.memory_space<vmem>>, vector<1x3x128xf32>,
    return
  }
  func.func @transform_0(%arg0: i32) -> (i32, i32) {
    %c0_i32 = arith.constant 0 : i32
    %c0_i32_0 = arith.constant 0 : i32
    %c0_i32_1 = arith.constant 0 : i32
    return %c0_i32, %c0_i32_0 : i32, i32
  }
  func.func @transform_1(%arg0: i32) -> (i32, i32) {
    %c0_i32 = arith.constant 0 : i32
    %c0_i32_0 = arith.constant 0 : i32
    return %c0_i32, %arg0 : i32, i32
  }
  func.func @transform_2(%arg0: i32) -> (i32, i32) {
    %c0_i32 = arith.constant 0 : i32
    %c0_i32_0 = arith.constant 0 : i32
    return %c0_i32, %arg0 : i32, i32
  }
  func.func @transform_3(%arg0: i32) -> (i32, i32, i32) {
    %c0_i32 = arith.constant 0 : i32
    %c0_i32_0 = arith.constant 0 : i32
    %c0_i32_1 = arith.constant 0 : i32
    return %arg0, %c0_i32, %c0_i32_0 : i32, i32, i32
  }
}

</mosaic_0001>

<llo_original>
// kernel: tpu_custom_call.1
$region0: #{tpu_custom_call.1}
  #allocation0 [shape = 'u32[]', space=smem, size = 0x4, offset = 0x4, fixed_abs, tag = 'smem constant byte address 0x4 - core index']
  #allocation1 [shape = 'u32[144,128]{1,0:T(1,128)}', space=vmem, size = 0x12000, scoped, tag = 'internal scratch']
  %s0 = inlined_call_operand.vmem [shape: f32[3,1], index: 0, kind: input, shape index: {}]
  %s1 = inlined_call_operand.vmem [shape: f32[3,128], index: 1, kind: input, shape index: {}]
  %s2 = inlined_call_operand.vmem [shape: f32[1,128], index: 2, kind: input, shape index: {}]
  %s3 = inlined_call_operand.vmem [shape: f32[1,3,128], index: 3, kind: output, shape index: {}]
  %s4 = sld [smem:[#allocation0]]
  $region22: #{tpu_custom_call.1} parent=0
    _
  %s6 = ssub.s32 1, %s4
  %s7 = scalar_select 0, %s6, %s4
  // Predicated region
  $region2: #{tpu_custom_call.1} parent=0 // pred_check
    _
  $region3: #{tpu_custom_call.1} parent=0 // pred_check_branch
    %9 = sbr.rel (0) target = $region5
  $region4: #{tpu_custom_call.1} parent=0 // pred_region
    _
  $region5: #{tpu_custom_call.1} parent=0 // pred_fallthru
    _
  // Predicated region
  $region6: #{tpu_custom_call.1} parent=0 // pred_check
    _
  $region7: #{tpu_custom_call.1} parent=0 // pred_check_branch
    %11 = sbr.rel (0) target = $region9
  $region8: #{tpu_custom_call.1} parent=0 // pred_region
    _
  $region9: #{tpu_custom_call.1} parent=0 // pred_fallthru
    _
  // Predicated region
  $region10: #{tpu_custom_call.1} parent=0 // pred_check
    _
  $region11: #{tpu_custom_call.1} parent=0 // pred_check_branch
    %13 = sbr.rel (0) target = $region13
  $region12: #{tpu_custom_call.1} parent=0 // pred_region
    _
  $region13: #{tpu_custom_call.1} parent=0 // pred_fallthru
    _
  %v14 = vld [vmem:[%s0] sm:$0x7]
  %v15 = vld [vmem:[%s1] sm:$0x7]
  %v16 = vld [vmem:[%s2] sm:$0x1]
  %v18 = vlaneseq
  %v19 = vshrl.u32 %v18, 7
  %v20 = vsub.s32 0, %v19
  %v21 = vrot.slane %v16, %v20
  %v23 = vsub.f32 %v21, %v15
  %25 = vset.pattern.permute.xlu0 0
  %26 = vperm.xlu0 %25, %v14
  %v27 = vpop.permute.xlu0 %26
  %v29 = vmul.f32 %v27, %v23
  %v30 = vsub.f32 0.0, %v23
  %v31 = vmax.f32 %v30, 0.0
  %v32 = vadd.f32 %v29, %v31
  %33 = vst [vmem:[%s3] sm:$0x7] %v32
  // Predicated region
  $region14: #{tpu_custom_call.1} parent=0 // pred_check
    _
  $region15: #{tpu_custom_call.1} parent=0 // pred_check_branch
    %35 = sbr.rel (0) target = $region17
  $region16: #{tpu_custom_call.1} parent=0 // pred_region
    _
  $region17: #{tpu_custom_call.1} parent=0 // pred_fallthru
    _
  // Predicated region
  $region18: #{tpu_custom_call.1} parent=0 // pred_check
    _
  $region19: #{tpu_custom_call.1} parent=0 // pred_check_branch
    %37 = sbr.rel (0) target = $region21
  $region20: #{tpu_custom_call.1} parent=0 // pred_region
    _
  $region21: #{tpu_custom_call.1} parent=0 // pred_fallthru
    _

</llo_original>
